<compile_context>
chip_gen: v5e
topology: v5e:2x2
jax: 0.10.0
libtpu: 0.0.40
codegen_flags: <defaults>
</compile_context>

<pallas_src>
import functools

import jax
import jax.numpy as jnp
import numpy as np
from jax.experimental import pallas as pl
from jax.experimental.pallas import tpu as pltpu


def _round_up(x, m):
    return ((x + m - 1) // m) * m


def _build_im2col_matrix():
    """(18, 32) 0/1 matrix S so that x.reshape(N, 18) @ S == im2col patches."""
    s = np.zeros((18, 32), np.float32)
    positions = [(0, 0), (0, 1), (1, 0), (1, 1)]          # conv1 output (h0, w0)
    for p, (h0, w0) in enumerate(positions):
        for c in range(2):
            for kh in range(2):
                for kw in range(2):
                    row = c * 9 + (h0 + kh) * 3 + (w0 + kw)   # x flat (c, h, w)
                    col = p * 8 + c * 4 + kh * 2 + kw          # patch flat
                    s[row, col] = 1.0
    return s


# --------------------------------------------------------------------------
# Kernel
# --------------------------------------------------------------------------
def convpredictor_kernel(x_ref,                 # (TM, 18) raw flattened boards (batch-major)
                         w_ref,                 # packed constants, one VMEM-resident array
                         out_ref,               # (9, TM) = [r1 ; r2 ; r3], batch on the lane axis
                         *, c2, hidden, layout):
    (o_w1, o_b1, o_w2, o_b2, o_wf, o_bf, o_w3, o_b3) = layout

    def blk(seg):                               # static slice of the packed constants
        off, rows, cols = seg
        return w_ref[off:off + rows, 0:cols]

    x = x_ref[...]                              # (TM, 18)

    # conv1 (im2col folded into the weight), column-major:  a1 = W1 @ x^T.
    # NT dot_general (contract the minor dim of both operands) is the standard
    # q @ k^T pattern; the result keeps the batch on the 128-lane axis.
    a1 = jax.lax.dot_general(blk(o_w1), x, (((1,), (1,)), ((), ())),
                             preferred_element_type=jnp.float32)
    a1 = jnp.maximum(a1 + blk(o_b1), 0.0)       # (4*C1, TM)

    # conv2 (single 1x1x1 output position) and pred1 share a1 -> one fused matmul.
    z2 = jnp.dot(blk(o_w2), a1, preferred_element_type=jnp.float32) + blk(o_b2)
    a2 = jnp.maximum(z2[:c2, :], 0.0)           # (C2, TM)
    h1 = z2[c2:c2 + 3, :]                       # pred1 pre-activation (3, TM)

    # fc1 and pred2 share a2 -> one fused matmul.
    z3 = jnp.dot(blk(o_wf), a2, preferred_element_type=jnp.float32) + blk(o_bf)
    hid = jnp.maximum(z3[:hidden, :], 0.0)      # (H, TM)
    h2 = z3[hidden:hidden + 3, :]               # pred2 pre-activation (3, TM)

    # pred3 consumes hidden.
    h3 = jnp.dot(blk(o_w3), hid, preferred_element_type=jnp.float32) + blk(o_b3)

    # clip(0,1) + L1 normalize.  Post-clip y >= 0 so no abs() is needed, and in
    # this layout the per-head sum is a 3-row sublane sum: pure VPU adds.
    def l1(h):
        y = jnp.clip(h, 0.0, 1.0)
        den = y[0:1, :] + y[1:2, :] + y[2:3, :]
        return y / jnp.maximum(den, 1e-12)      # exact divide (matches F.normalize eps)

    out_ref[0:3, :] = l1(h1)
    out_ref[3:6, :] = l1(h2)
    out_ref[6:9, :] = l1(h3)


# --------------------------------------------------------------------------
# One-time weight preparation (fold / fuse / transpose / pack)
# --------------------------------------------------------------------------
def prepare_params(params, c1, c2, hidden):
    """Fold im2col into conv1, fuse heads with their trunk matmuls, transpose
    everything to the column-major orientation the kernel uses, and pack all 8
    constants into one f32 array (8-row-aligned segments)."""
    w1f = params['conv1_w'].reshape(c1, 8)                       # per-position kernel
    w1big = jax.scipy.linalg.block_diag(*([w1f] * 4))            # (4*C1, 32)
    s = jnp.asarray(_build_im2col_matrix())                      # (18, 32), 0/1 entries
    w1t = w1big @ s.T                                            # (4*C1, 18)  conv1 + im2col fold
    b1 = jnp.tile(params['conv1_b'], 4)[:, None]                 # (4*C1, 1)

    # conv1 output rows are ordered (position, channel); permute conv2 / pred1
    # weights (which consume PyTorch's (channel, position) flattening) to match.
    w2p = jnp.transpose(params['conv2_w'].reshape(c2, c1, 4), (0, 2, 1)).reshape(c2, 4 * c1)
    wp1p = jnp.transpose(params['pred1_w'].reshape(3, c1, 4), (0, 2, 1)).reshape(3, 4 * c1)

    w2h1t = jnp.concatenate([w2p, wp1p], axis=0)                               # (C2+3, 4*C1)
    b2h1 = jnp.concatenate([params['conv2_b'], params['pred1_b']])[:, None]    # (C2+3, 1)
    wfct = jnp.concatenate([params['fc1_w'], params['pred2_w']], axis=0)       # (H+3, C2)
    bfc = jnp.concatenate([params['fc1_b'], params['pred2_b']])[:, None]       # (H+3, 1)
    wp3t = params['pred3_w']                                                   # (3, H)
    bp3 = params['pred3_b'][:, None]                                           # (3, 1)

    pieces = [w1t, b1, w2h1t, b2h1, wfct, bfc, wp3t, bp3]
    ncols = max(int(p.shape[1]) for p in pieces)
    layout, off = [], 0
    for p in pieces:
        layout.append((off, int(p.shape[0]), int(p.shape[1])))
        off = _round_up(off + int(p.shape[0]), 8)                # sublane-aligned segments
    packed = jnp.zeros((_round_up(off, 8), ncols), jnp.float32)
    for p, (o, r, c) in zip(pieces, layout):
        packed = packed.at[o:o + r, :c].set(p.astype(jnp.float32))
    return packed, tuple(layout)


def init_params(key, c1, c2, hidden):
    """Deterministic PyTorch-style (uniform +-1/sqrt(fan_in)) parameter init."""
    def uni(k, shape, fan_in):
        b = 1.0 / np.sqrt(fan_in)
        return jax.random.uniform(k, shape, jnp.float32, -b, b)

    ks = jax.random.split(key, 12)
    return dict(
        conv1_w=uni(ks[0], (c1, 2, 1, 2, 2), 8),
        conv1_b=uni(ks[1], (c1,), 8),
        conv2_w=uni(ks[2], (c2, c1, 1, 2, 2), c1 * 4),
        conv2_b=uni(ks[3], (c2,), c1 * 4),
        fc1_w=uni(ks[4], (hidden, c2), c2),
        fc1_b=uni(ks[5], (hidden,), c2),
        pred1_w=uni(ks[6], (3, c1 * 4), c1 * 4),
        pred1_b=uni(ks[7], (3,), c1 * 4),
        pred2_w=uni(ks[8], (3, c2), c2),
        pred2_b=uni(ks[9], (3,), c2),
        pred3_w=uni(ks[10], (3, hidden), hidden),
        pred3_b=uni(ks[11], (3,), hidden),
    )


# --------------------------------------------------------------------------
# Wrapper
# --------------------------------------------------------------------------
def conv_predictor_forward(x, packed_params, layout, c2, hidden, block_m=4096):
    """x: (N, 2, 1, 3, 3) NCDHW float32 -> (r1, r2, r3), each (N, 3)."""
    n = x.shape[0]
    x18 = x.reshape(n, 18).astype(jnp.float32)        # (c, d=1, h, w) flattened per row

    # ---- batch tiling: large blocks; for big batches force an even step count
    # so the "parallel" grid axis splits across v7x's two TensorCores. ----
    if n > 128:
        num_steps = 2 * pl.cdiv(n, 2 * block_m)        # even, >= 2
        tm = _round_up(pl.cdiv(n, num_steps), 128)     # lane-aligned (9, tm) output blocks
    else:
        num_steps = 1
        tm = _round_up(max(n, 1), 8)
    n_pad = num_steps * tm
    if n_pad != n:
        x18 = jnp.pad(x18, ((0, n_pad - n), (0, 0)))

    # v5e's scoped-VMEM default is only 16 MiB; raise the limit only when a very
    # large block_m actually needs it (default block_m never does).
    est = tm * 4 * (2 * 128 + 2 * 16 + 160) + (1 << 20)
    vmem_limit = min(2 * est, 96 * 1024 * 1024) if est > 12 * 1024 * 1024 else None

    kernel = functools.partial(convpredictor_kernel, c2=c2, hidden=hidden, layout=layout)
    out = pl.pallas_call(
        kernel,
        out_shape=jax.ShapeDtypeStruct((9, n_pad), jnp.float32),
        grid=(num_steps,),
        in_specs=[
            # Note: if a v7x bundle/xprof check shows exposed DMA on this stream
            # after enlarging block_m, bump it to pipeline_mode=pl.Buffered(3).
            pl.BlockSpec((tm, 18), lambda i: (i, 0)),
            pl.BlockSpec(packed_params.shape, lambda i: (0, 0)),   # constants, VMEM-resident
        ],
        out_specs=pl.BlockSpec((9, tm), lambda i: (0, i)),
        compiler_params=pltpu.CompilerParams(
            dimension_semantics=("parallel",),
            vmem_limit_bytes=vmem_limit),
    )(x18, packed_params)

    # Heads are stored feature-major; slice the three 3-row bands and transpose back.
    return out[0:3, :n].T, out[3:6, :n].T, out[6:9, :n].T


# --------------------------------------------------------------------------
# Pure-JAX reference (matches the PyTorch forward exactly, eval mode)
# --------------------------------------------------------------------------
def reference_forward(x, params, c1, c2, hidden):
    n = x.shape[0]
    dn = ('NCDHW', 'OIDHW', 'NCDHW')
    a1 = jax.lax.conv_general_dilated(x, params['conv1_w'], (1, 1, 1), 'VALID',
                                      dimension_numbers=dn)
    a1 = jnp.maximum(a1 + params['conv1_b'][None, :, None, None, None], 0.0)
    a2 = jax.lax.conv_general_dilated(a1, params['conv2_w'], (1, 1, 1), 'VALID',
                                      dimension_numbers=dn)
    a2 = jnp.maximum(a2 + params['conv2_b'][None, :, None, None, None], 0.0)
    a2 = a2.reshape(n, c2)
    hid = jnp.maximum(a2 @ params['fc1_w'].T + params['fc1_b'], 0.0)

    def head(act, w, b):
        y = jnp.clip(act @ w.T + b, 0.0, 1.0)
        return y / jnp.maximum(jnp.sum(jnp.abs(y), axis=1, keepdims=True), 1e-12)

    r1 = head(a1.reshape(n, c1 * 4), params['pred1_w'], params['pred1_b'])
    r2 = head(a2, params['pred2_w'], params['pred2_b'])
    r3 = head(hid, params['pred3_w'], params['pred3_b'])
    return r1, r2, r3


if __name__ == "__main__":
    C1, C2, HIDDEN = 8, 16, 32   # conv1_channels, conv2_channels, hidden_size
    N = 2                        # batch

    key = jax.random.PRNGKey(0)
    kx, kp, kx2 = jax.random.split(key, 3)
    params = init_params(kp, C1, C2, HIDDEN)
    packed, layout = prepare_params(params, C1, C2, HIDDEN)   # one-time weight prep

    x = jax.random.uniform(kx, (N, 2, 1, 3, 3), jnp.float32)  # NCDHW board encoding
    r1, r2, r3 = conv_predictor_forward(x, packed, layout, C2, HIDDEN)
    jax.block_until_ready((r1, r2, r3))

    ref1, ref2, ref3 = reference_forward(x, params, C1, C2, HIDDEN)
    np.testing.assert_allclose(np.asarray(r1), np.asarray(ref1), rtol=1e-5, atol=1e-5)
    np.testing.assert_allclose(np.asarray(r2), np.asarray(ref2), rtol=1e-5, atol=1e-5)
    np.testing.assert_allclose(np.asarray(r3), np.asarray(ref3), rtol=1e-5, atol=1e-5)

    # Also exercise the multi-step (even, lane-aligned) grid path.
    N2 = 300
    x2 = jax.random.uniform(kx2, (N2, 2, 1, 3, 3), jnp.float32)
    s1, s2, s3 = conv_predictor_forward(x2, packed, layout, C2, HIDDEN, block_m=128)
    jax.block_until_ready((s1, s2, s3))
    g1, g2, g3 = reference_forward(x2, params, C1, C2, HIDDEN)
    np.testing.assert_allclose(np.asarray(s1), np.asarray(g1), rtol=1e-5, atol=1e-5)
    np.testing.assert_allclose(np.asarray(s2), np.asarray(g2), rtol=1e-5, atol=1e-5)
    np.testing.assert_allclose(np.asarray(s3), np.asarray(g3), rtol=1e-5, atol=1e-5)

    print("KERNEL_OK")
</pallas_src>

<mosaic_0001>
module attributes {stable_mosaic.version = 11 : i64} {
  func.func @convpredictor_kernel(%arg0: i32, %arg1: memref<8x18xf32, #tpu.memory_space<vmem>>, %arg2: memref<208x32xf32, #tpu.memory_space<vmem>>, %arg3: memref<9x8xf32, #tpu.memory_space<vmem>>) attributes {dimension_semantics = [#tpu.dimension_semantics<parallel>], iteration_bounds = array<i64: 1>, scalar_prefetch = 0 : i64, scratch_operands = 0 : i64, tpu.core_type = #tpu.core_type<tc>, window_params = [{transform_indices = @transform_0, window_bounds = array<i64: 8, 18>}, {pipeline_mode = #tpu.pipeline_mode<synchronous>, transform_indices = @transform_1, window_bounds = array<i64: 208, 32>}, {transform_indices = @transform_2, window_bounds = array<i64: 9, 8>}]} {
    %c0 = arith.constant 0 : index
    %c0_0 = arith.constant 0 : index
    %0 = vector.load %arg1[%c0, %c0_0] : memref<8x18xf32, #tpu.memory_space<vmem>>, vector<8x18xf32>
    %c0_1 = arith.constant 0 : index
    %c0_2 = arith.constant 0 : index
    %1 = vector.load %arg2[%c0_1, %c0_2] : memref<208x32xf32, #tpu.memory_space<vmem>>, vector<32x18xf32>
    %cst = arith.constant dense<0.000000e+00> : vector<32x8xf32>
    %2 = tpu.matmul %1, %0, %cst {dimension_numbers = #tpu.dot_dimension_numbers<[1], [1], [0], [0], [0, 0, 1, 0], [], []>} : vector<32x18xf32>, vector<8x18xf32>, vector<32x8xf32> -> vector<32x8xf32>
    %c32 = arith.constant 32 : index
    %c0_3 = arith.constant 0 : index
    %3 = vector.load %arg2[%c32, %c0_3] : memref<208x32xf32, #tpu.memory_space<vmem>>, vector<32x1xf32>
    %4 = vector.broadcast %3 : vector<32x1xf32> to vector<32x8xf32>
    %5 = arith.addf %2, %4 : vector<32x8xf32>
    %cst_4 = arith.constant 0.000000e+00 : f32
    %6 = vector.broadcast %cst_4 : f32 to vector<32x8xf32>
    %7 = arith.maximumf %5, %6 : vector<32x8xf32>
    %c64 = arith.constant 64 : index
    %c0_5 = arith.constant 0 : index
    %8 = vector.load %arg2[%c64, %c0_5] : memref<208x32xf32, #tpu.memory_space<vmem>>, vector<19x32xf32>
    %cst_6 = arith.constant dense<0.000000e+00> : vector<19x8xf32>
    %9 = tpu.matmul %8, %7, %cst_6 {dimension_numbers = #tpu.dot_dimension_numbers<[1], [0], [0], [1], [0, 0, 1, 1], [], []>} : vector<19x32xf32>, vector<32x8xf32>, vector<19x8xf32> -> vector<19x8xf32>
    %c88 = arith.constant 88 : index
    %c0_7 = arith.constant 0 : index
    %10 = vector.load %arg2[%c88, %c0_7] : memref<208x32xf32, #tpu.memory_space<vmem>>, vector<19x1xf32>
    %11 = vector.broadcast %10 : vector<19x1xf32> to vector<19x8xf32>
    %12 = arith.addf %9, %11 : vector<19x8xf32>
    %13 = vector.extract_strided_slice %12 {offsets = [0, 0], sizes = [16, 8], strides = [1, 1]} : vector<19x8xf32> to vector<16x8xf32>
    %cst_8 = arith.constant 0.000000e+00 : f32
    %14 = vector.broadcast %cst_8 : f32 to vector<16x8xf32>
    %15 = arith.maximumf %13, %14 : vector<16x8xf32>
    %16 = vector.extract_strided_slice %12 {offsets = [16, 0], sizes = [3, 8], strides = [1, 1]} : vector<19x8xf32> to vector<3x8xf32>
    %c112 = arith.constant 112 : index
    %c0_9 = arith.constant 0 : index
    %17 = vector.load %arg2[%c112, %c0_9] : memref<208x32xf32, #tpu.memory_space<vmem>>, vector<35x16xf32>
    %cst_10 = arith.constant dense<0.000000e+00> : vector<35x8xf32>
    %18 = tpu.matmul %17, %15, %cst_10 {dimension_numbers = #tpu.dot_dimension_numbers<[1], [0], [0], [1], [0, 0, 1, 1], [], []>} : vector<35x16xf32>, vector<16x8xf32>, vector<35x8xf32> -> vector<35x8xf32>
    %c152 = arith.constant 152 : index
    %c0_11 = arith.constant 0 : index
    %19 = vector.load %arg2[%c152, %c0_11] : memref<208x32xf32, #tpu.memory_space<vmem>>, vector<35x1xf32>
    %20 = vector.broadcast %19 : vector<35x1xf32> to vector<35x8xf32>
    %21 = arith.addf %18, %20 : vector<35x8xf32>
    %22 = vector.extract_strided_slice %21 {offsets = [0, 0], sizes = [32, 8], strides = [1, 1]} : vector<35x8xf32> to vector<32x8xf32>
    %cst_12 = arith.constant 0.000000e+00 : f32
    %23 = vector.broadcast %cst_12 : f32 to vector<32x8xf32>
    %24 = arith.maximumf %22, %23 : vector<32x8xf32>
    %25 = vector.extract_strided_slice %21 {offsets = [32, 0], sizes = [3, 8], strides = [1, 1]} : vector<35x8xf32> to vector<3x8xf32>
    %c192 = arith.constant 192 : index
    %c0_13 = arith.constant 0 : index
    %26 = vector.load %arg2[%c192, %c0_13] : memref<208x32xf32, #tpu.memory_space<vmem>>, vector<3x32xf32>
    %cst_14 = arith.constant dense<0.000000e+00> : vector<3x8xf32>
    %27 = tpu.matmul %26, %24, %cst_14 {dimension_numbers = #tpu.dot_dimension_numbers<[1], [0], [0], [1], [0, 0, 1, 1], [], []>} : vector<3x32xf32>, vector<32x8xf32>, vector<3x8xf32> -> vector<3x8xf32>
    %c200 = arith.constant 200 : index
    %c0_15 = arith.constant 0 : index
    %28 = vector.load %arg2[%c200, %c0_15] : memref<208x32xf32, #tpu.memory_space<vmem>>, vector<3x1xf32>
    %29 = vector.broadcast %28 : vector<3x1xf32> to vector<3x8xf32>
    %30 = arith.addf %27, %29 : vector<3x8xf32>
    %cst_16 = arith.constant 0.000000e+00 : f32
    %cst_17 = arith.constant 1.000000e+00 : f32
    %31 = vector.broadcast %cst_16 : f32 to vector<3x8xf32>
    %32 = arith.maximumf %31, %16 : vector<3x8xf32>
    %33 = vector.broadcast %cst_17 : f32 to vector<3x8xf32>
    %34 = arith.minimumf %33, %32 : vector<3x8xf32>
    %35 = vector.extract_strided_slice %34 {offsets = [0, 0], sizes = [1, 8], strides = [1, 1]} : vector<3x8xf32> to vector<1x8xf32>
    %36 = vector.extract_strided_slice %34 {offsets = [1, 0], sizes = [1, 8], strides = [1, 1]} : vector<3x8xf32> to vector<1x8xf32>
    %37 = arith.addf %35, %36 : vector<1x8xf32>
    %38 = vector.extract_strided_slice %34 {offsets = [2, 0], sizes = [1, 8], strides = [1, 1]} : vector<3x8xf32> to vector<1x8xf32>
    %39 = arith.addf %37, %38 : vector<1x8xf32>
    %cst_18 = arith.constant 9.99999996E-13 : f32
    %40 = vector.broadcast %cst_18 : f32 to vector<1x8xf32>
    %41 = arith.maximumf %39, %40 : vector<1x8xf32>
    %42 = vector.broadcast %41 : vector<1x8xf32> to vector<3x8xf32>
    %43 = arith.divf %34, %42 : vector<3x8xf32>
    %c0_19 = arith.constant 0 : index
    %c0_20 = arith.constant 0 : index
    %44 = vector.load %arg3[%c0_19, %c0_20] : memref<9x8xf32, #tpu.memory_space<vmem>>, vector<3x8xf32>
    tpu.vector_store %arg3[%c0_19, %c0_20], %43 {strides = array<i32>} : memref<9x8xf32, #tpu.memory_space<vmem>>, vector<3x8xf32>,
    %cst_21 = arith.constant 0.000000e+00 : f32
    %cst_22 = arith.constant 1.000000e+00 : f32
    %45 = vector.broadcast %cst_21 : f32 to vector<3x8xf32>
    %46 = arith.maximumf %45, %25 : vector<3x8xf32>
    %47 = vector.broadcast %cst_22 : f32 to vector<3x8xf32>
    %48 = arith.minimumf %47, %46 : vector<3x8xf32>
    %49 = vector.extract_strided_slice %48 {offsets = [0, 0], sizes = [1, 8], strides = [1, 1]} : vector<3x8xf32> to vector<1x8xf32>
    %50 = vector.extract_strided_slice %48 {offsets = [1, 0], sizes = [1, 8], strides = [1, 1]} : vector<3x8xf32> to vector<1x8xf32>
    %51 = arith.addf %49, %50 : vector<1x8xf32>
    %52 = vector.extract_strided_slice %48 {offsets = [2, 0], sizes = [1, 8], strides = [1, 1]} : vector<3x8xf32> to vector<1x8xf32>
    %53 = arith.addf %51, %52 : vector<1x8xf32>
    %cst_23 = arith.constant 9.99999996E-13 : f32
    %54 = vector.broadcast %cst_23 : f32 to vector<1x8xf32>
    %55 = arith.maximumf %53, %54 : vector<1x8xf32>
    %56 = vector.broadcast %55 : vector<1x8xf32> to vector<3x8xf32>
    %57 = arith.divf %48, %56 : vector<3x8xf32>
    %c3 = arith.constant 3 : index
    %c0_24 = arith.constant 0 : index
    %58 = vector.load %arg3[%c3, %c0_24] : memref<9x8xf32, #tpu.memory_space<vmem>>, vector<3x8xf32>
    tpu.vector_store %arg3[%c3, %c0_24], %57 {strides = array<i32>} : memref<9x8xf32, #tpu.memory_space<vmem>>, vector<3x8xf32>,
    %cst_25 = arith.constant 0.000000e+00 : f32
    %cst_26 = arith.constant 1.000000e+00 : f32
    %59 = vector.broadcast %cst_25 : f32 to vector<3x8xf32>
    %60 = arith.maximumf %59, %30 : vector<3x8xf32>
    %61 = vector.broadcast %cst_26 : f32 to vector<3x8xf32>
    %62 = arith.minimumf %61, %60 : vector<3x8xf32>
    %63 = vector.extract_strided_slice %62 {offsets = [0, 0], sizes = [1, 8], strides = [1, 1]} : vector<3x8xf32> to vector<1x8xf32>
    %64 = vector.extract_strided_slice %62 {offsets = [1, 0], sizes = [1, 8], strides = [1, 1]} : vector<3x8xf32> to vector<1x8xf32>
    %65 = arith.addf %63, %64 : vector<1x8xf32>
    %66 = vector.extract_strided_slice %62 {offsets = [2, 0], sizes = [1, 8], strides = [1, 1]} : vector<3x8xf32> to vector<1x8xf32>
    %67 = arith.addf %65, %66 : vector<1x8xf32>
    %cst_27 = arith.constant 9.99999996E-13 : f32
    %68 = vector.broadcast %cst_27 : f32 to vector<1x8xf32>
    %69 = arith.maximumf %67, %68 : vector<1x8xf32>
    %70 = vector.broadcast %69 : vector<1x8xf32> to vector<3x8xf32>
    %71 = arith.divf %62, %70 : vector<3x8xf32>
    %c6 = arith.constant 6 : index
    %c0_28 = arith.constant 0 : index
    %72 = vector.load %arg3[%c6, %c0_28] : memref<9x8xf32, #tpu.memory_space<vmem>>, vector<3x8xf32>
    tpu.vector_store %arg3[%c6, %c0_28], %71 {strides = array<i32>} : memref<9x8xf32, #tpu.memory_space<vmem>>, vector<3x8xf32>,
    return
  }
  func.func @transform_0(%arg0: i32) -> (i32, i32) {
    %c0_i32 = arith.constant 0 : i32
    %c0_i32_0 = arith.constant 0 : i32
    return %arg0, %c0_i32 : i32, i32
  }
  func.func @transform_1(%arg0: i32) -> (i32, i32) {
    %c0_i32 = arith.constant 0 : i32
    %c0_i32_0 = arith.constant 0 : i32
    %c0_i32_1 = arith.constant 0 : i32
    return %c0_i32, %c0_i32_0 : i32, i32
  }
  func.func @transform_2(%arg0: i32) -> (i32, i32) {
    %c0_i32 = arith.constant 0 : i32
    %c0_i32_0 = arith.constant 0 : i32
    return %c0_i32, %arg0 : i32, i32
  }
}

</mosaic_0001>

<llo_original>
// kernel: tpu_custom_call.1
$region0: #{tpu_custom_call.1}
  #allocation0 [shape = 'u32[]', space=smem, size = 0x4, offset = 0x4, fixed_abs, tag = 'smem constant byte address 0x4 - core index']
  #allocation1 [shape = 'u32[72,128]{1,0:T(1,128)}', space=vmem, size = 0x9000, scoped, tag = 'internal scratch']
  %s0 = inlined_call_operand.vmem [shape: f32[8,18], index: 0, kind: input, shape index: {}]
  %s1 = inlined_call_operand.vmem [shape: f32[208,32], index: 1, kind: input, shape index: {}]
  %s2 = inlined_call_operand.vmem [shape: f32[9,8], index: 2, kind: output, shape index: {}]
  %s3 = sld [smem:[#allocation0]]
  $region18: #{tpu_custom_call.1} parent=0
    _
  %s5 = ssub.s32 1, %s3
  %s6 = scalar_select 0, %s5, %s3
  // Predicated region
  $region2: #{tpu_custom_call.1} parent=0 // pred_check
    _
  $region3: #{tpu_custom_call.1} parent=0 // pred_check_branch
    %8 = sbr.rel (0) target = $region5
  $region4: #{tpu_custom_call.1} parent=0 // pred_region
    _
  $region5: #{tpu_custom_call.1} parent=0 // pred_fallthru
    _
  // Predicated region
  $region6: #{tpu_custom_call.1} parent=0 // pred_check
    _
  $region7: #{tpu_custom_call.1} parent=0 // pred_check_branch
    %10 = sbr.rel (0) target = $region9
  $region8: #{tpu_custom_call.1} parent=0 // pred_region
    _
  $region9: #{tpu_custom_call.1} parent=0 // pred_fallthru
    _
  %v11 = vld [vmem:[%s0] sm:$0xff]
  %v12 = vld [vmem:[%s1] sm:$0xff]
  %v13 = vld [vmem:[%s1 + $0x8] sm:$0xff]
  %v14 = vld [vmem:[%s1 + $0x10] sm:$0xff]
  %v15 = vld [vmem:[%s1 + $0x18] sm:$0xff]
  %v16 = vld [vmem:[%s1 + $0x20] sm:$0xff]
  %v17 = vld [vmem:[%s1 + $0x28] sm:$0xff]
  %v18 = vld [vmem:[%s1 + $0x30] sm:$0xff]
  %v19 = vld [vmem:[%s1 + $0x38] sm:$0xff]
  %21 = vset.pattern.permute.xlu0 0
  %22 = vperm.xlu0 %21, %v16
  %v23 = vpop.permute.xlu0 %22
  %26 = vset.pattern.permute.xlu0 0
  %27 = vperm.xlu0 %26, %v17
  %v28 = vpop.permute.xlu0 %27
  %31 = vset.pattern.permute.xlu0 0
  %32 = vperm.xlu0 %31, %v18
  %v33 = vpop.permute.xlu0 %32
  %36 = vset.pattern.permute.xlu0 0
  %37 = vperm.xlu0 %36, %v19
  %v38 = vpop.permute.xlu0 %37
  %vm40 = vcmask 146432
  %v42 = vsel %vm40, %v12, 0
  %v45 = vsel %vm40, %v13, 0
  %v48 = vsel %vm40, %v14, 0
  %v51 = vsel %vm40, %v15, 0
  %v54 = vsel %vm40, %v11, 0
  %56 = vmatpush.xpose.msra.mxu0 0.0
  %57 = vmatpush.xpose.msra.mxu0 0.0
  %58 = vmatpush.xpose.msra.mxu0 0.0
  %59 = vmatpush.xpose.msra.mxu0 0.0
  %60 = vmatpush.xpose.msra.mxu0 0.0
  %61 = vmatpush.xpose.msra.mxu0 0.0
  %62 = vmatpush.xpose.msra.mxu0 0.0
  %63 = vmatpush.xpose.msra.mxu0 0.0
  %64 = vmatpush.xpose.msra.mxu0 0.0
  %65 = vmatpush.xpose.msra.mxu0 0.0
  %66 = vmatpush.xpose.msra.mxu0 0.0
  %67 = vmatpush.xpose.msra.mxu0 0.0
  %68 = vmatpush.xpose.msra.mxu0 0.0
  %69 = vmatpush.xpose.msra.mxu0 0.0
  %70 = vmatpush.xpose.msra.mxu0 0.0
  %71 = vmatpush.xpose.msra.mxu0 %v54
  %72 = vmatmul.f32.gmra.mxu0 %v42
  %v73 = vpop.f32.mrf.mxu0
  %v74 = vadd.f32 %v23, %v73
  %75 = vmatmul.f32.gmra.mxu0 %v45
  %v76 = vpop.f32.mrf.mxu0
  %v77 = vadd.f32 %v28, %v76
  %78 = vmatmul.f32.gmra.mxu0 %v48
  %v79 = vpop.f32.mrf.mxu0
  %v80 = vadd.f32 %v33, %v79
  %81 = vmatmul.f32.gmra.mxu0 %v51
  %v82 = vpop.f32.mrf.mxu0
  %v83 = vadd.f32 %v38, %v82
  %84 = vdwg.mxu0
  %v85 = vmax.f32 %v74, 0.0
  %v86 = vmax.f32 %v77, 0.0
  %v87 = vmax.f32 %v80, 0.0
  %v88 = vmax.f32 %v83, 0.0
  %v89 = vld [vmem:[%s1 + $0x40] sm:$0xff]
  %v90 = vld [vmem:[%s1 + $0x48] sm:$0xff]
  %v91 = vld [vmem:[%s1 + $0x50] sm:$0x7]
  %v92 = vld [vmem:[%s1 + $0x58] sm:$0xff]
  %v93 = vld [vmem:[%s1 + $0x60] sm:$0xff]
  %v94 = vld [vmem:[%s1 + $0x68] sm:$0x7]
  %96 = vset.pattern.permute.xlu0 0
  %97 = vperm.xlu0 %96, %v92
  %v98 = vpop.permute.xlu0 %97
  %101 = vset.pattern.permute.xlu0 0
  %102 = vperm.xlu0 %101, %v93
  %v103 = vpop.permute.xlu0 %102
  %106 = vset.pattern.permute.xlu0 0
  %107 = vperm.xlu0 %106, %v94
  %v108 = vpop.permute.xlu0 %107
  %vm110 = vcmask 261120
  %v112 = vsel %vm110, %v89, 0
  %v115 = vsel %vm110, %v90, 0
  %v118 = vsel %vm110, %v91, 0
  %120 = vmatpush.msra.mxu0 0.0
  %121 = vmatpush.msra.mxu0 0.0
  %122 = vmatpush.msra.mxu0 0.0
  %123 = vmatpush.msra.mxu0 0.0
  %124 = vmatpush.msra.mxu0 0.0
  %125 = vmatpush.msra.mxu0 0.0
  %126 = vmatpush.msra.mxu0 0.0
  %127 = vmatpush.msra.mxu0 0.0
  %128 = vmatpush.msra.mxu0 0.0
  %129 = vmatpush.msra.mxu0 0.0
  %130 = vmatpush.msra.mxu0 0.0
  %131 = vmatpush.msra.mxu0 0.0
  %132 = vmatpush.msra.mxu0 %v88
  %133 = vmatpush.msra.mxu0 %v87
  %134 = vmatpush.msra.mxu0 %v86
  %135 = vmatpush.msra.mxu0 %v85
  %136 = vmatmul.f32.gmra.mxu0 %v112
  %v137 = vpop.f32.mrf.mxu0
  %v138 = vadd.f32 %v98, %v137
  %139 = vmatmul.f32.gmra.mxu0 %v115
  %v140 = vpop.f32.mrf.mxu0
  %v141 = vadd.f32 %v103, %v140
  %142 = vmatmul.f32.gmra.mxu0 %v118
  %v143 = vpop.f32.mrf.mxu0
  %v144 = vadd.f32 %v108, %v143
  %145 = vdwg.mxu0
  %v146 = vmax.f32 %v138, 0.0
  %v147 = vmax.f32 %v141, 0.0
  %v148 = vld [vmem:[%s1 + $0x70] sm:$0xff]
  %v149 = vld [vmem:[%s1 + $0x78] sm:$0xff]
  %v150 = vld [vmem:[%s1 + $0x80] sm:$0xff]
  %v151 = vld [vmem:[%s1 + $0x88] sm:$0xff]
  %v152 = vld [vmem:[%s1 + $0x90] sm:$0x7]
  %v153 = vld [vmem:[%s1 + $0x98] sm:$0xff]
  %v154 = vld [vmem:[%s1 + $0xa0] sm:$0xff]
  %v155 = vld [vmem:[%s1 + $0xa8] sm:$0xff]
  %v156 = vld [vmem:[%s1 + $0xb0] sm:$0xff]
  %v157 = vld [vmem:[%s1 + $0xb8] sm:$0x7]
  %159 = vset.pattern.permute.xlu0 0
  %160 = vperm.xlu0 %159, %v153
  %v161 = vpop.permute.xlu0 %160
  %164 = vset.pattern.permute.xlu0 0
  %165 = vperm.xlu0 %164, %v154
  %v166 = vpop.permute.xlu0 %165
  %169 = vset.pattern.permute.xlu0 0
  %170 = vperm.xlu0 %169, %v155
  %v171 = vpop.permute.xlu0 %170
  %174 = vset.pattern.permute.xlu0 0
  %175 = vperm.xlu0 %174, %v156
  %v176 = vpop.permute.xlu0 %175
  %179 = vset.pattern.permute.xlu0 0
  %180 = vperm.xlu0 %179, %v157
  %v181 = vpop.permute.xlu0 %180
  %vm183 = vcmask 130048
  %v185 = vsel %vm183, %v148, 0
  %v188 = vsel %vm183, %v149, 0
  %v191 = vsel %vm183, %v150, 0
  %v194 = vsel %vm183, %v151, 0
  %v197 = vsel %vm183, %v152, 0
  %199 = vmatpush.msra.mxu0 0.0
  %200 = vmatpush.msra.mxu0 0.0
  %201 = vmatpush.msra.mxu0 0.0
  %202 = vmatpush.msra.mxu0 0.0
  %203 = vmatpush.msra.mxu0 0.0
  %204 = vmatpush.msra.mxu0 0.0
  %205 = vmatpush.msra.mxu0 0.0
  %206 = vmatpush.msra.mxu0 0.0
  %207 = vmatpush.msra.mxu0 0.0
  %208 = vmatpush.msra.mxu0 0.0
  %209 = vmatpush.msra.mxu0 0.0
  %210 = vmatpush.msra.mxu0 0.0
  %211 = vmatpush.msra.mxu0 0.0
  %212 = vmatpush.msra.mxu0 0.0
  %213 = vmatpush.msra.mxu0 %v147
  %214 = vmatpush.msra.mxu0 %v146
  %215 = vmatmul.f32.gmra.mxu0 %v185
  %v216 = vpop.f32.mrf.mxu0
  %v217 = vadd.f32 %v161, %v216
  %218 = vmatmul.f32.gmra.mxu0 %v188
  %v219 = vpop.f32.mrf.mxu0
  %v220 = vadd.f32 %v166, %v219
  %221 = vmatmul.f32.gmra.mxu0 %v191
  %v222 = vpop.f32.mrf.mxu0
  %v223 = vadd.f32 %v171, %v222
  %224 = vmatmul.f32.gmra.mxu0 %v194
  %v225 = vpop.f32.mrf.mxu0
  %v226 = vadd.f32 %v176, %v225
  %227 = vmatmul.f32.gmra.mxu0 %v197
  %v228 = vpop.f32.mrf.mxu0
  %v229 = vadd.f32 %v181, %v228
  %230 = vdwg.mxu0
  %v231 = vmax.f32 %v217, 0.0
  %v232 = vmax.f32 %v220, 0.0
  %v233 = vmax.f32 %v223, 0.0
  %v234 = vmax.f32 %v226, 0.0
  %v235 = vld [vmem:[%s1 + $0xc0] sm:$0x7]
  %v236 = vld [vmem:[%s1 + $0xc8] sm:$0x7]
  %238 = vset.pattern.permute.xlu0 0
  %239 = vperm.xlu0 %238, %v236
  %v240 = vpop.permute.xlu0 %239
  %v243 = vsel %vm110, %v235, 0
  %245 = vmatpush.msra.mxu0 0.0
  %246 = vmatpush.msra.mxu0 0.0
  %247 = vmatpush.msra.mxu0 0.0
  %248 = vmatpush.msra.mxu0 0.0
  %249 = vmatpush.msra.mxu0 0.0
  %250 = vmatpush.msra.mxu0 0.0
  %251 = vmatpush.msra.mxu0 0.0
  %252 = vmatpush.msra.mxu0 0.0
  %253 = vmatpush.msra.mxu0 0.0
  %254 = vmatpush.msra.mxu0 0.0
  %255 = vmatpush.msra.mxu0 0.0
  %256 = vmatpush.msra.mxu0 0.0
  %257 = vmatpush.msra.mxu0 %v234
  %258 = vmatpush.msra.mxu0 %v233
  %259 = vmatpush.msra.mxu0 %v232
  %260 = vmatpush.msra.mxu0 %v231
  %261 = vmatmul.f32.gmra.mxu0 %v243
  %v262 = vpop.f32.mrf.mxu0
  %v263 = vadd.f32 %v240, %v262
  %264 = vdwg.mxu0
  %v265 = vmax.f32 %v144, 0.0
  %v266 = vmin.f32 %v265, 1.0
  %v268 = vrot.slane %v266, 1
  %v270 = vadd.f32 %v266, %v268
  %v271 = vrot.slane %v266, 2
  %v273 = vadd.f32 %v270, %v271
  %v274 = vmax.f32 %v273, 1e-12
  %v275 = vperm.slane %v274, 0
  %v276 = vrcp.pop %v275
  %v277 = vmul.f32 %v275, %v276
  %v278 = vsub.f32 1.0, %v277
  %v279 = vmul.f32 %v276, %v278
  %v280 = vadd.f32 %v276, %v279
  %vm281 = vweird.f32 %v275
  %vm282 = vweird.f32 %v276
  %vm283 = vmor %vm281, %vm282
  %v284 = vsel %vm283, %v276, %v280
  %v285 = vand.u32 2147483647, %v275
  %vm286 = vcmp.eq.f32.partialorder %v285, 8.507059e+37
  %v287 = vand.u32 %v275, 2147483648
  %v288 = vor.u32 1.1754944e-38, %v287
  %v289 = vsel %vm286, %v288, %v284
  %v290 = vmul.f32 %v266, %v289
  %vm291 = vcmask 59392
  %292 = vst.msk [vmem:[%s2] sm:$0x7] %vm291, %v290
  %v293 = vmax.f32 %v229, 0.0
  %v294 = vmin.f32 %v293, 1.0
  %v296 = vrot.slane %v294, 1
  %v298 = vadd.f32 %v294, %v296
  %v299 = vrot.slane %v294, 2
  %v301 = vadd.f32 %v298, %v299
  %v302 = vmax.f32 %v301, 1e-12
  %v303 = vperm.slane %v302, 0
  %v304 = vrcp.pop %v303
  %v305 = vmul.f32 %v303, %v304
  %v306 = vsub.f32 1.0, %v305
  %v307 = vmul.f32 %v304, %v306
  %v308 = vadd.f32 %v304, %v307
  %vm309 = vweird.f32 %v303
  %vm310 = vweird.f32 %v304
  %vm311 = vmor %vm309, %vm310
  %v312 = vsel %vm311, %v304, %v308
  %v313 = vand.u32 2147483647, %v303
  %vm314 = vcmp.eq.f32.partialorder %v313, 8.507059e+37
  %v315 = vand.u32 %v303, 2147483648
  %v316 = vor.u32 1.1754944e-38, %v315
  %v317 = vsel %vm314, %v316, %v312
  %v318 = vmul.f32 %v294, %v317
  %319 = vst.msk [vmem:[%s2 + $0x3] sm:$0x7] %vm291, %v318
  %v320 = vmax.f32 %v263, 0.0
  %v321 = vmin.f32 %v320, 1.0
  %v323 = vrot.slane %v321, 1
  %v325 = vadd.f32 %v321, %v323
  %v326 = vrot.slane %v321, 2
  %v328 = vadd.f32 %v325, %v326
  %v329 = vmax.f32 %v328, 1e-12
  %v330 = vperm.slane %v329, 0
  %v331 = vrcp.pop %v330
  %v332 = vmul.f32 %v330, %v331
  %v333 = vsub.f32 1.0, %v332
  %v334 = vmul.f32 %v331, %v333
  %v335 = vadd.f32 %v331, %v334
  %vm336 = vweird.f32 %v330
  %vm337 = vweird.f32 %v331
  %vm338 = vmor %vm336, %vm337
  %v339 = vsel %vm338, %v331, %v335
  %v340 = vand.u32 2147483647, %v330
  %vm341 = vcmp.eq.f32.partialorder %v340, 8.507059e+37
  %v342 = vand.u32 %v330, 2147483648
  %v343 = vor.u32 1.1754944e-38, %v342
  %v344 = vsel %vm341, %v343, %v339
  %v345 = vmul.f32 %v321, %v344
  %346 = vst.msk [vmem:[%s2 + $0x6] sm:$0x7] %vm291, %v345
  // Predicated region
  $region10: #{tpu_custom_call.1} parent=0 // pred_check
    _
  $region11: #{tpu_custom_call.1} parent=0 // pred_check_branch
    %348 = sbr.rel (0) target = $region13
  $region12: #{tpu_custom_call.1} parent=0 // pred_region
    _
  $region13: #{tpu_custom_call.1} parent=0 // pred_fallthru
    _
  // Predicated region
  $region14: #{tpu_custom_call.1} parent=0 // pred_check
    _
  $region15: #{tpu_custom_call.1} parent=0 // pred_check_branch
    %350 = sbr.rel (0) target = $region17
  $region16: #{tpu_custom_call.1} parent=0 // pred_region
    _
  $region17: #{tpu_custom_call.1} parent=0 // pred_fallthru
    _

</llo_original>
